<compile_context>
chip_gen: v6e
topology: v6e:2x2x1
jax: 0.10.0
libtpu: 0.0.40
codegen_flags: <defaults>
</compile_context>

<pallas_src>
import jax
import jax.numpy as jnp
from jax.experimental import pallas as pl
from jax.experimental.pallas import tpu as pltpu

_MIB = 1024 * 1024


def _round_up(x, m):
    return ((x + m - 1) // m) * m


def _vmem_capacity_bytes():
    """Physical VMEM per TensorCore; conservative 64 MiB (v7x) if unknown."""
    try:
        info = pltpu.get_tpu_info()
        cap = getattr(info, "vmem_capacity_bytes", None)
        if cap:
            return int(cap)
    except Exception:
        pass
    return 64 * _MIB


def _make_softmax_pair_kernel(mode, inv_temp, N, HW, bn, tile_hw,
                              need_b_mask, need_hw_mask):
    """Kernel over one (bn, C, tile_hw) tile of both operands.

    Softmax runs over the sublane axis (C, axis=-2).  The per-tile partial sum
    (reduced over batch rows and C only) is written as a lane-dense row; the
    final lane reduction happens in plain JAX.
    """

    def kernel(x_ref, t_ref, o_ref):
        x = x_ref[...].astype(jnp.float32)
        t = t_ref[...].astype(jnp.float32)
        if inv_temp != 1.0:
            x = x * inv_temp
            t = t * inv_temp

        def softmax_stats(z):
            m = jnp.max(z, axis=-2, keepdims=True)
            e = jnp.exp(z - m)
            s = jnp.sum(e, axis=-2, keepdims=True)
            return m, e, s

        mx, ex, sx = softmax_stats(x)
        mt, et, st = softmax_stats(t)

        if mode == "mse":
            d = (ex * pl.reciprocal(sx, approx=False)
                 - et * pl.reciprocal(st, approx=False))
            contrib = d * d
        else:  # "kl": softmax(t) * (log_softmax(t) - log_softmax(x))
            p_t = et * pl.reciprocal(st, approx=False)
            log_p_t = (t - mt) - jnp.log(st)
            log_p_x = (x - mx) - jnp.log(sx)
            contrib = p_t * (log_p_t - log_p_x)

        # Edge-tile masking for the cdiv grid.  jnp.where (select, not multiply)
        # so garbage in out-of-bounds rows/lanes can never leak NaNs.
        shape = contrib.shape
        mask = None
        if need_b_mask:
            b_idx = jax.lax.broadcasted_iota(jnp.int32, shape, 0)
            mask = (pl.program_id(0) * bn + b_idx) < N
        if need_hw_mask:
            h_idx = jax.lax.broadcasted_iota(jnp.int32, shape, 2)
            h_ok = (pl.program_id(1) * tile_hw + h_idx) < HW
            mask = h_ok if mask is None else (mask & h_ok)
        if mask is not None:
            contrib = jnp.where(mask, contrib, 0.0)

        # Reduce batch + sublane(C) only -> lane-dense (1, tile_hw) partial row.
        partial = jnp.sum(jnp.sum(contrib, axis=0), axis=0, keepdims=True)
        o_ref[0, 0, :, :] = partial

    return kernel


def _softmax_pair_reduce(input_logits, target_logits, *, mode, inv_temp=1.0,
                         target_block_bytes=None):
    """Tiled sum of a per-element function of softmax(input,1), softmax(target,1)."""
    assert mode in ("mse", "kl")
    assert input_logits.shape == target_logits.shape
    assert input_logits.ndim >= 2

    x, t = input_logits, target_logits
    if x.ndim == 2:
        # 2-D logits (batch, classes): classes on sublanes, batch on lanes.
        x = jnp.transpose(x)[None]
        t = jnp.transpose(t)[None]

    N, C = int(x.shape[0]), int(x.shape[1])
    HW = 1
    for s in x.shape[2:]:
        HW *= int(s)
    # Contiguous (free) reshape: softmax axis C stays in place, no HBM transpose.
    x = x.reshape(N, C, HW)
    t = t.reshape(N, C, HW)

    # ---- per-generation budgets (v5e/v6e: 128 MiB VMEM, v7x: 64 MiB) ----
    vmem_cap = _vmem_capacity_bytes()
    if vmem_cap >= 96 * _MIB:
        vmem_limit = 80 * _MIB
        auto_block = 6 * _MIB        # per-input f32 compute-tile budget
    else:
        vmem_limit = 44 * _MIB
        auto_block = 3 * _MIB
    if target_block_bytes is None:
        target_block_bytes = auto_block

    # ---- tile selection: cdiv grid, edge tiles masked in-kernel ----
    # Budget in f32 compute bytes with C padded to the 8-sublane tile; this
    # upper-bounds the in-kernel footprint for both f32 and bf16 HBM inputs.
    c_pad = _round_up(C, 8)
    row_bytes = c_pad * 4
    hw_cap = max(128, (target_block_bytes // row_bytes) // 128 * 128)
    if HW <= hw_cap:
        tile_hw = HW                 # full lane extent: always a legal block dim
    else:
        tile_hw = hw_cap             # multiple of 128; last tile masked
    bn = min(N, max(1, target_block_bytes // (row_bytes * tile_hw)))

    # Guarantee >= 2 grid steps whenever possible (pipelining + both v7x TCs).
    if pl.cdiv(N, bn) * pl.cdiv(HW, tile_hw) < 2:
        if N >= 2:
            bn = pl.cdiv(N, 2)
        elif HW > 128:
            tile_hw = max(128, _round_up(pl.cdiv(HW, 2), 128))

    n_nb = pl.cdiv(N, bn)
    n_hb = pl.cdiv(HW, tile_hw)
    need_b_mask = (N % bn) != 0
    need_hw_mask = (HW % tile_hw) != 0

    kernel = _make_softmax_pair_kernel(mode, float(inv_temp), N, HW, bn, tile_hw,
                                       need_b_mask, need_hw_mask)

    in_map = lambda i, j: (i, 0, j)
    out_map = lambda i, j: (i, j, 0, 0)

    partials = pl.pallas_call(
        kernel,
        # Trailing dims of every out block == trailing dims of the array, so the
        # per-tile partial rows are lane-dense and layout-legal for any shape.
        out_shape=jax.ShapeDtypeStruct((n_nb, n_hb, 1, tile_hw), jnp.float32),
        grid_spec=pltpu.PrefetchScalarGridSpec(
            num_scalar_prefetch=0,
            grid=(n_nb, n_hb),
            in_specs=[
                pl.BlockSpec((bn, C, tile_hw), in_map),
                pl.BlockSpec((bn, C, tile_hw), in_map),
            ],
            out_specs=pl.BlockSpec((1, 1, 1, tile_hw), out_map),
        ),
        compiler_params=pltpu.CompilerParams(
            dimension_semantics=("parallel", "parallel"),
            vmem_limit_bytes=vmem_limit,
        ),
    )(x, t)

    # Tiny final reduction over the per-tile lane-dense partials.
    return jnp.sum(partials)


def softmax_mse_loss(input_logits, target_logits, *, target_block_bytes=None):
    """sum((softmax(input, dim=1) - softmax(target, dim=1)) ** 2)."""
    return _softmax_pair_reduce(input_logits, target_logits, mode="mse",
                                target_block_bytes=target_block_bytes)


def distill_kl_loss(y_s, y_t, temperature, *, target_block_bytes=None):
    """DistillKL.forward: kl_div(log_softmax(y_s/T,1), softmax(y_t/T,1), 'sum') * T^2 / bs."""
    temperature = float(temperature)
    kl_sum = _softmax_pair_reduce(y_s, y_t, mode="kl",
                                  inv_temp=1.0 / temperature,
                                  target_block_bytes=target_block_bytes)
    return kl_sum * (temperature ** 2) / y_s.shape[0]


# ---- pure-JAX references ----
def _reference_mse(a, b):
    pa = jax.nn.softmax(a.astype(jnp.float32), axis=1)
    pb = jax.nn.softmax(b.astype(jnp.float32), axis=1)
    return jnp.sum((pa - pb) ** 2)


def _reference_kl(y_s, y_t, T):
    p_s = jax.nn.log_softmax(y_s.astype(jnp.float32) / T, axis=1)
    p_t = jax.nn.softmax(y_t.astype(jnp.float32) / T, axis=1)
    return jnp.sum(p_t * (jnp.log(p_t) - p_s)) * (T ** 2) / y_s.shape[0]


if __name__ == "__main__":
    key = jax.random.PRNGKey(0)
    k1, k2, k3, k4, k5, k6, k7, k8 = jax.random.split(key, 8)

    # 1) Softmax-MSE consistency on NCHW feature maps (softmax over channels).
    shape = (2, 4, 16, 16)
    x = jax.random.normal(k1, shape, dtype=jnp.float32)
    t = jax.random.normal(k2, shape, dtype=jnp.float32)
    got = jax.block_until_ready(softmax_mse_loss(x, t))
    ref = _reference_mse(x, t)
    assert jnp.allclose(got, ref, rtol=1e-4, atol=1e-5), (got, ref)

    # 2) DistillKL (the SLA distillation term) on 2-D logits.
    temperature = 4.0
    y_s = jax.random.normal(k3, (8, 10), dtype=jnp.float32)
    y_t = jax.random.normal(k4, (8, 10), dtype=jnp.float32)
    got_kl = jax.block_until_ready(distill_kl_loss(y_s, y_t, temperature))
    ref_kl = _reference_kl(y_s, y_t, temperature)
    assert jnp.allclose(got_kl, ref_kl, rtol=1e-4, atol=1e-6), (got_kl, ref_kl)

    # 3) Ragged batch: exercises the cdiv grid + batch-edge masking path.
    xa = jax.random.normal(k5, (3, 4, 10, 10), dtype=jnp.float32)
    ta = jax.random.normal(k6, (3, 4, 10, 10), dtype=jnp.float32)
    got_a = jax.block_until_ready(softmax_mse_loss(xa, ta))
    ref_a = _reference_mse(xa, ta)
    assert jnp.allclose(got_a, ref_a, rtol=1e-4, atol=1e-5), (got_a, ref_a)

    # 4) Ragged lanes + bf16 HBM inputs: lane-edge masking with a tiny tile budget.
    xb = jax.random.normal(k7, (2, 4, 24, 24), dtype=jnp.bfloat16)
    tb = jax.random.normal(k8, (2, 4, 24, 24), dtype=jnp.bfloat16)
    got_b = jax.block_until_ready(softmax_mse_loss(xb, tb, target_block_bytes=16 * 1024))
    ref_b = _reference_mse(xb, tb)
    assert jnp.allclose(got_b, ref_b, rtol=1e-4, atol=1e-5), (got_b, ref_b)

    print("KERNEL_OK")
</pallas_src>

<mosaic_0001>
module attributes {stable_mosaic.version = 11 : i64} {
  func.func @kernel(%arg0: i32, %arg1: i32, %arg2: memref<1x4x256xf32, #tpu.memory_space<vmem>>, %arg3: memref<1x4x256xf32, #tpu.memory_space<vmem>>, %arg4: memref<1x1x1x256xf32, #tpu.memory_space<vmem>>) attributes {dimension_semantics = [#tpu.dimension_semantics<parallel>, #tpu.dimension_semantics<parallel>], iteration_bounds = array<i64: 2, 1>, scalar_prefetch = 0 : i64, scratch_operands = 0 : i64, tpu.core_type = #tpu.core_type<tc>, window_params = [{transform_indices = @transform_0, window_bounds = array<i64: 1, 4, 256>}, {transform_indices = @transform_1, window_bounds = array<i64: 1, 4, 256>}, {transform_indices = @transform_2, window_bounds = array<i64: 1, 1, 1, 256>}]} {
    %c0 = arith.constant 0 : index
    %c0_0 = arith.constant 0 : index
    %c0_1 = arith.constant 0 : index
    %0 = vector.load %arg2[%c0, %c0_0, %c0_1] : memref<1x4x256xf32, #tpu.memory_space<vmem>>, vector<1x4x256xf32>
    %c0_2 = arith.constant 0 : index
    %c0_3 = arith.constant 0 : index
    %c0_4 = arith.constant 0 : index
    %1 = vector.load %arg3[%c0_2, %c0_3, %c0_4] : memref<1x4x256xf32, #tpu.memory_space<vmem>>, vector<1x4x256xf32>
    %cst = arith.constant dense<0xFF800000> : vector<1x256xf32>
    %2 = vector.multi_reduction <maximumf>, %0, %cst [1] : vector<1x4x256xf32> to vector<1x256xf32>
    %3 = vector.shape_cast %2 : vector<1x256xf32> to vector<1x1x256xf32>
    %4 = vector.broadcast %3 : vector<1x1x256xf32> to vector<1x4x256xf32>
    %5 = arith.subf %0, %4 : vector<1x4x256xf32>
    %6 = math.exp %5 : vector<1x4x256xf32>
    %cst_5 = arith.constant dense<0.000000e+00> : vector<1x256xf32>
    %7 = vector.multi_reduction <add>, %6, %cst_5 [1] : vector<1x4x256xf32> to vector<1x256xf32>
    %8 = vector.shape_cast %7 : vector<1x256xf32> to vector<1x1x256xf32>
    %cst_6 = arith.constant dense<0xFF800000> : vector<1x256xf32>
    %9 = vector.multi_reduction <maximumf>, %1, %cst_6 [1] : vector<1x4x256xf32> to vector<1x256xf32>
    %10 = vector.shape_cast %9 : vector<1x256xf32> to vector<1x1x256xf32>
    %11 = vector.broadcast %10 : vector<1x1x256xf32> to vector<1x4x256xf32>
    %12 = arith.subf %1, %11 : vector<1x4x256xf32>
    %13 = math.exp %12 : vector<1x4x256xf32>
    %cst_7 = arith.constant dense<0.000000e+00> : vector<1x256xf32>
    %14 = vector.multi_reduction <add>, %13, %cst_7 [1] : vector<1x4x256xf32> to vector<1x256xf32>
    %15 = vector.shape_cast %14 : vector<1x256xf32> to vector<1x1x256xf32>
    %16 = tpu.reciprocal %8 : vector<1x1x256xf32> -> vector<1x1x256xf32>
    %17 = vector.broadcast %16 : vector<1x1x256xf32> to vector<1x4x256xf32>
    %18 = arith.mulf %6, %17 : vector<1x4x256xf32>
    %19 = tpu.reciprocal %15 : vector<1x1x256xf32> -> vector<1x1x256xf32>
    %20 = vector.broadcast %19 : vector<1x1x256xf32> to vector<1x4x256xf32>
    %21 = arith.mulf %13, %20 : vector<1x4x256xf32>
    %22 = arith.subf %18, %21 : vector<1x4x256xf32>
    %23 = arith.mulf %22, %22 : vector<1x4x256xf32>
    %cst_8 = arith.constant dense<0.000000e+00> : vector<4x256xf32>
    %24 = vector.multi_reduction <add>, %23, %cst_8 [0] : vector<1x4x256xf32> to vector<4x256xf32>
    %cst_9 = arith.constant dense<0.000000e+00> : vector<256xf32>
    %25 = vector.multi_reduction <add>, %24, %cst_9 [0] : vector<4x256xf32> to vector<256xf32>
    %26 = vector.shape_cast %25 : vector<256xf32> to vector<1x256xf32>
    %c0_10 = arith.constant 0 : index
    %c0_11 = arith.constant 0 : index
    %c0_12 = arith.constant 0 : index
    %c0_13 = arith.constant 0 : index
    %27 = vector.load %arg4[%c0_10, %c0_11, %c0_12, %c0_13] : memref<1x1x1x256xf32, #tpu.memory_space<vmem>>, vector<1x1x1x256xf32>
    %28 = vector.shape_cast %27 : vector<1x1x1x256xf32> to vector<1x256xf32>
    %29 = vector.shape_cast %26 : vector<1x256xf32> to vector<1x1x1x256xf32>
    tpu.vector_store %arg4[%c0_10, %c0_11, %c0_12, %c0_13], %29 {strides = array<i32>} : memref<1x1x1x256xf32, #tpu.memory_space<vmem>>, vector<1x1x1x256xf32>,
    return
  }
  func.func @transform_0(%arg0: i32, %arg1: i32) -> (i32, i32, i32) {
    %c0_i32 = arith.constant 0 : i32
    %c0_i32_0 = arith.constant 0 : i32
    return %arg0, %c0_i32, %arg1 : i32, i32, i32
  }
  func.func @transform_1(%arg0: i32, %arg1: i32) -> (i32, i32, i32) {
    %c0_i32 = arith.constant 0 : i32
    %c0_i32_0 = arith.constant 0 : i32
    return %arg0, %c0_i32, %arg1 : i32, i32, i32
  }
  func.func @transform_2(%arg0: i32, %arg1: i32) -> (i32, i32, i32, i32) {
    %c0_i32 = arith.constant 0 : i32
    %c0_i32_0 = arith.constant 0 : i32
    %c0_i32_1 = arith.constant 0 : i32
    return %arg0, %arg1, %c0_i32, %c0_i32_0 : i32, i32, i32, i32
  }
}

</mosaic_0001>

<llo_original>
// kernel: tpu_custom_call.1
$region0: #{tpu_custom_call.1}
  #allocation0 [shape = 'u32[]', space=smem, size = 0x4, offset = 0x4, fixed_abs, tag = 'smem constant byte address 0x4 - core index']
  #allocation1 [shape = 'u32[144,128]{1,0:T(1,128)}', space=vmem, size = 0x12000, scoped, tag = 'internal scratch']
  %s0 = inlined_call_operand.hbm [shape: f32[2,4,256], index: 0, kind: input, shape index: {}]
  %s1 = inlined_call_operand.hbm [shape: f32[2,4,256], index: 1, kind: input, shape index: {}]
  %s2 = inlined_call_operand.hbm [shape: f32[2,1,1,256], index: 2, kind: output, shape index: {}]
  %s3 = sld [smem:[#allocation0]]
  $region49: #{tpu_custom_call.1} parent=0
    _
  %s5 = ssub.s32 1, %s3
  %s6 = scalar_select 0, %s5, %s3
  $region1: #{tpu_custom_call.1} parent=0
    #allocation2 [shape = 'u8[8192]{0}', space=vmem, size = 0x2000, scoped, tag = 'input window, operand 0']
    #allocation3 [shape = 's32[2]{0}', space=sflag, size = 0x8, scoped, tag = 'scoped memory for tpu_custom_call.1']
    #allocation4 [shape = 's32[2]{0}', space=sflag, size = 0x8, scoped, tag = 'scoped memory for tpu_custom_call.1']
    #allocation5 [shape = 'u8[8192]{0}', space=vmem, size = 0x2000, scoped, tag = 'input window, operand 1']
    #allocation6 [shape = 's32[2]{0}', space=sflag, size = 0x8, scoped, tag = 'scoped memory for tpu_custom_call.1']
    #allocation7 [shape = 'u8[2048]{0}', space=vmem, size = 0x800, scoped, tag = 'output window, operand 0']
    %7 = vsyncpa [#allocation3], 0
    %s8 = scalar_lea.sflag [#allocation3], 1
    %9 = vsyncpa %s8, 0
    %10 = vsyncpa [#allocation6], 0
    %s11 = scalar_lea.sflag [#allocation6], 1
    %12 = vsyncpa %s11, 0
    %13 = vsyncpa [#allocation4], 0
    %s14 = scalar_lea.sflag [#allocation4], 1
    %15 = vsyncpa %s14, 0
    loop: start=0, step=1, limit=4
    $region2: #{tpu_custom_call.1} parent=1 // loop_pre_header
      _
    $region3: #{tpu_custom_call.1} parent=1 // loop_header
      %s17 = sphi 0, %s21
      %p18 = scmp.ge.s32.totalorder %s17, 4
      %s24 = sphi 0, %s36
      %s25 = sphi 0, %s32
      %s26 = sphi 0, %s24
      %s27 = sphi 0, %s25
      %s28 = sphi 0, %s26
      %s29 = sphi 0, %s27
      %s41 = sphi 0, %s43
      %s44 = sphi 0, %s41
      %s45 = sphi 0, %s44
      %s61 = sphi 0, %s45
      %s69 = sphi 0, %s71
      %s72 = sphi 0, %s69
      %s73 = sphi 0, %s72
      %s89 = sphi 0, %s73
      %s97 = sphi 0, %s99
      %s100 = sphi 0, %s97
      %s101 = sphi 0, %s100
      %s117 = sphi 0, %s101
    $region4: #{tpu_custom_call.1} parent=1 // loop_header_branch
      %20 = sbr.rel (%p18) target = $region8
    $region5: #{tpu_custom_call.1} parent=1 // loop_body
      %s22 = ssub.s32 %s17, 1
      %s23 = ssub.s32 %s17, 2
      %s30 = sadd.s32 1, %s25
      %p31 = scmp.ge.s32.totalorder %s30, 1
      %s32 = scalar_select %p31, 0, %s30
      %s33 = sadd.s32 1, %s24
      %s34 = scalar_select %p31, %s33, %s24
      %p35 = scmp.ge.s32.totalorder %s34, 2
      %s36 = scalar_select %p35, 0, %s34
      %s37 = ssub.s32 %s24, %s36
      %s38 = ssub.s32 %s25, %s32
      %s39 = sor.u32 %s37, %s38
      %p40 = scmp.eq.s32.totalorder %s39, 0
      %s42 = sadd.s32 %s41, 1
      %s43 = scalar_select %p40, %s41, %s42
      %p46 = pneg %p40
      %p47 = scmp.eq.s32.totalorder %s17, 1
      %p48 = por %p46, %p47
      %p49 = scmp.ne.s32.totalorder %s41, %s44
      %p50 = scmp.eq.s32.totalorder %s17, 0
      %p51 = por %p49, %p50
      %p52 = scmp.ne.s32.totalorder %s41, %s44
      %p53 = scmp.eq.s32.totalorder %s22, 1
      %p54 = por %p52, %p53
      %p55 = scmp.ne.s32.totalorder %s44, %s45
      %p56 = scmp.eq.s32.totalorder %s22, 0
      %p57 = por %p55, %p56
      %p58 = scmp.ne.s32.totalorder %s44, %s45
      %p59 = scmp.eq.s32.totalorder %s23, 1
      %p60 = por %p58, %p59
      %p62 = scmp.ne.s32.totalorder %s45, %s61
      %p63 = scmp.eq.s32.totalorder %s23, 0
      %p64 = por %p62, %p63
      %s65 = ssub.s32 %s24, %s36
      %s66 = ssub.s32 %s25, %s32
      %s67 = sor.u32 %s65, %s66
      %p68 = scmp.eq.s32.totalorder %s67, 0
      %s70 = sadd.s32 %s69, 1
      %s71 = scalar_select %p68, %s69, %s70
      %p74 = pneg %p68
      %p75 = scmp.eq.s32.totalorder %s17, 1
      %p76 = por %p74, %p75
      %p77 = scmp.ne.s32.totalorder %s69, %s72
      %p78 = scmp.eq.s32.totalorder %s17, 0
      %p79 = por %p77, %p78
      %p80 = scmp.ne.s32.totalorder %s69, %s72
      %p81 = scmp.eq.s32.totalorder %s22, 1
      %p82 = por %p80, %p81
      %p83 = scmp.ne.s32.totalorder %s72, %s73
      %p84 = scmp.eq.s32.totalorder %s22, 0
      %p85 = por %p83, %p84
      %p86 = scmp.ne.s32.totalorder %s72, %s73
      %p87 = scmp.eq.s32.totalorder %s23, 1
      %p88 = por %p86, %p87
      %p90 = scmp.ne.s32.totalorder %s73, %s89
      %p91 = scmp.eq.s32.totalorder %s23, 0
      %p92 = por %p90, %p91
      %s93 = ssub.s32 %s24, %s36
      %s94 = ssub.s32 %s25, %s32
      %s95 = sor.u32 %s93, %s94
      %p96 = scmp.eq.s32.totalorder %s95, 0
      %s98 = sadd.s32 %s97, 1
      %s99 = scalar_select %p96, %s97, %s98
      %p102 = pneg %p96
      %p103 = scmp.eq.s32.totalorder %s17, 1
      %p104 = por %p102, %p103
      %p105 = scmp.ne.s32.totalorder %s97, %s100
      %p106 = scmp.eq.s32.totalorder %s17, 0
      %p107 = por %p105, %p106
      %p108 = scmp.ne.s32.totalorder %s97, %s100
      %p109 = scmp.eq.s32.totalorder %s22, 1
      %p110 = por %p108, %p109
      %p111 = scmp.ne.s32.totalorder %s100, %s101
      %p112 = scmp.eq.s32.totalorder %s22, 0
      %p113 = por %p111, %p112
      %p114 = scmp.ne.s32.totalorder %s100, %s101
      %p115 = scmp.eq.s32.totalorder %s23, 1
      %p116 = por %p114, %p115
      %p118 = scmp.ne.s32.totalorder %s101, %s117
      %p119 = scmp.eq.s32.totalorder %s23, 0
      %p120 = por %p118, %p119
      %p121 = scmp.le.s32.totalorder 1, %s17
      %p122 = scmp.lt.s32.totalorder %s17, 3
      %p123 = pnand %p121, %p122
      %p124 = pneg %p123
      // Predicated region
      $region9: #{tpu_custom_call.1} parent=5 // pred_check
        _
      $region10: #{tpu_custom_call.1} parent=5 // pred_check_branch
        %126 = sbr.rel (%p123) target = $region12
      $region11: #{tpu_custom_call.1} parent=5 // pred_region
        %s127 = ssub.s32 %s17, 1
      $region12: #{tpu_custom_call.1} parent=5 // pred_fallthru
        _
      %p128 = scmp.lt.s32.totalorder %s17, 2
      // Predicated region
      $region13: #{tpu_custom_call.1} parent=5 // pred_check
        %p129 = pneg %p128
      $region14: #{tpu_custom_call.1} parent=5 // pred_check_branch
        %131 = sbr.rel (%p129) target = $region16
      $region15: #{tpu_custom_call.1} parent=5 // pred_region
        // Predicated region
        $region17: #{tpu_custom_call.1} parent=15 // pred_check
          %p132 = pneg %p51
        $region18: #{tpu_custom_call.1} parent=15 // pred_check_branch
          %134 = sbr.rel (%p132) target = $region20
        $region19: #{tpu_custom_call.1} parent=15 // pred_region
          %s135 = sand.u32 %s41, 1
          %s136 = scalar_lea.sflag [#allocation3], %s135
          %s137 = sand.u32 %s41, 1
          %s138 = smul.addr %s137, 8
          %s139 = scalar_lea.vmem [#allocation2], %s138
          %s140 = smul.u32 2, %s25
          %s142 = ssub.s32 128, 128
          %143 = vsyncadd %s136, %s142
          %s144 = smul.addr %s24, 2
          %s145 = sadd.s32 %s140, %s144
          %s146 = smul.addr %s145, 64
          %s147 = scalar_lea.hbm %s0, %s146
          %s149 = sshll.u32 %s139, 4
          %s150 = int_to_ptr.vmem [resolvable:$true] %s149
          %152 = dma.hbm_to_vmem [thread:$0]  %s147, 128, %s150, %s136
        $region20: #{tpu_custom_call.1} parent=15 // pred_fallthru
          _
        // Predicated region
        $region21: #{tpu_custom_call.1} parent=15 // pred_check
          %p153 = pneg %p79
        $region22: #{tpu_custom_call.1} parent=15 // pred_check_branch
          %155 = sbr.rel (%p153) target = $region24
        $region23: #{tpu_custom_call.1} parent=15 // pred_region
          %s156 = sand.u32 %s69, 1
          %s157 = scalar_lea.sflag [#allocation6], %s156
          %s158 = sand.u32 %s69, 1
          %s159 = smul.addr %s158, 8
          %s160 = scalar_lea.vmem [#allocation5], %s159
          %s161 = smul.u32 2, %s25
          %s163 = ssub.s32 128, 128
          %164 = vsyncadd %s157, %s163
          %s165 = smul.addr %s24, 2
          %s166 = sadd.s32 %s161, %s165
          %s167 = smul.addr %s166, 64
          %s168 = scalar_lea.hbm %s1, %s167
          %s170 = sshll.u32 %s160, 4
          %s171 = int_to_ptr.vmem [resolvable:$true] %s170
          %173 = dma.hbm_to_vmem [thread:$0]  %s168, 128, %s171, %s157
        $region24: #{tpu_custom_call.1} parent=15 // pred_fallthru
          _
      $region16: #{tpu_custom_call.1} parent=5 // pred_fallthru
        _
      %p174 = scmp.le.s32.totalorder 1, %s17
      %p175 = scmp.lt.s32.totalorder %s17, 3
      %p176 = pnand %p174, %p175
      %p177 = pneg %p176
      // Predicated region
      $region25: #{tpu_custom_call.1} parent=5 // pred_check
        _
      $region26: #{tpu_custom_call.1} parent=5 // pred_check_branch
        %179 = sbr.rel (%p176) target = $region28
      $region27: #{tpu_custom_call.1} parent=5 // pred_region
        %s180 = ssub.s32 %s17, 1
        %s181 = sand.u32 %s44, 1
        %s182 = scalar_lea.sflag [#allocation3], %s181
        %s183 = sand.u32 %s44, 1
        %s184 = smul.addr %s183, 8
        %s185 = scalar_lea.vmem [#allocation2], %s184
        // Predicated region
        $region29: #{tpu_custom_call.1} parent=27 // pred_check
          %p186 = pneg %p57
        $region30: #{tpu_custom_call.1} parent=27 // pred_check_branch
          %188 = sbr.rel (%p186) target = $region32
        $region31: #{tpu_custom_call.1} parent=27 // pred_region
          %189 = dma.done %s182, 128
        $region32: #{tpu_custom_call.1} parent=27 // pred_fallthru
          _
        %s190 = sand.u32 %s72, 1
        %s191 = scalar_lea.sflag [#allocation6], %s190
        %s192 = sand.u32 %s72, 1
        %s193 = smul.addr %s192, 8
        %s194 = scalar_lea.vmem [#allocation5], %s193
        // Predicated region
        $region33: #{tpu_custom_call.1} parent=27 // pred_check
          %p195 = pneg %p85
        $region34: #{tpu_custom_call.1} parent=27 // pred_check_branch
          %197 = sbr.rel (%p195) target = $region36
        $region35: #{tpu_custom_call.1} parent=27 // pred_region
          %198 = dma.done %s191, 128
        $region36: #{tpu_custom_call.1} parent=27 // pred_fallthru
          _
        %s199 = sand.u32 %s44, 1
        %s200 = scalar_lea.sflag [#allocation3], %s199
        %s201 = sand.u32 %s44, 1
        %s202 = smul.addr %s201, 8
        %s203 = scalar_lea.vmem [#allocation2], %s202
        %p204 = pneg %p57
        %p205 = pneg %p54
        %s206 = sand.u32 %s72, 1
        %s207 = scalar_lea.sflag [#allocation6], %s206
        %s208 = sand.u32 %s72, 1
        %s209 = smul.addr %s208, 8
        %s210 = scalar_lea.vmem [#allocation5], %s209
        %p211 = pneg %p85
        %p212 = pneg %p82
        %p213 = pneg %p113
        %p214 = pneg %p110
        %s215 = sand.u32 %s100, 1
        %s216 = scalar_lea.sflag [#allocation4], %s215
        %s217 = sand.u32 %s100, 1
        %s218 = smul.addr %s217, 2
        %s219 = scalar_lea.vmem [#allocation7], %s218
        %s220 = smul.u32 2, %s27
        %s221 = smul.u32 2, %s27
        %v222 = vld [vmem:[%s185] sm:$0xff]
        %v223 = vld [vmem:[%s194] sm:$0xff]
        %v225 = vcombine.high %v222, %v222
        %vm227 = vcmask 1043456
        %v228 = vsel %vm227, %v222, -inf
        %v229 = vrot.slane %v228, 4
        %v230 = vmax.f32 %v228, %v229
        %v231 = vrot.slane %v230, 2
        %v232 = vmax.f32 %v230, %v231
        %v233 = vrot.slane %v232, 1
        %v234 = vmax.f32 %v232, %v233
        %v235 = vsel %vm227, %v225, -inf
        %v236 = vrot.slane %v235, 4
        %v237 = vmax.f32 %v235, %v236
        %v238 = vrot.slane %v237, 2
        %v239 = vmax.f32 %v237, %v238
        %v240 = vrot.slane %v239, 1
        %v241 = vmax.f32 %v239, %v240
        %v244 = vcombine.low %v234, %v241
        %v246 = vsub.f32 %v222, %v244
        %v247 = vmul.f32 %v246, 1.442695
        %v248 = vpow.pop %v247
        %v250 = vcombine.high %v248, %v248
        %v252 = vsel %vm227, %v248, 0.0
        %v253 = vrot.slane %v252, 4
        %v254 = vadd.f32 %v252, %v253
        %v255 = vrot.slane %v254, 2
        %v256 = vadd.f32 %v254, %v255
        %v257 = vrot.slane %v256, 1
        %v258 = vadd.f32 %v256, %v257
        %v259 = vsel %vm227, %v250, 0.0
        %v260 = vrot.slane %v259, 4
        %v261 = vadd.f32 %v259, %v260
        %v262 = vrot.slane %v261, 2
        %v263 = vadd.f32 %v261, %v262
        %v264 = vrot.slane %v263, 1
        %v265 = vadd.f32 %v263, %v264
        %v267 = vcombine.high %v223, %v223
        %v269 = vsel %vm227, %v223, -inf
        %v270 = vrot.slane %v269, 4
        %v271 = vmax.f32 %v269, %v270
        %v272 = vrot.slane %v271, 2
        %v273 = vmax.f32 %v271, %v272
        %v274 = vrot.slane %v273, 1
        %v275 = vmax.f32 %v273, %v274
        %v276 = vsel %vm227, %v267, -inf
        %v277 = vrot.slane %v276, 4
        %v278 = vmax.f32 %v276, %v277
        %v279 = vrot.slane %v278, 2
        %v280 = vmax.f32 %v278, %v279
        %v281 = vrot.slane %v280, 1
        %v282 = vmax.f32 %v280, %v281
        %v285 = vcombine.low %v275, %v282
        %v287 = vsub.f32 %v223, %v285
        %v288 = vmul.f32 %v287, 1.442695
        %v289 = vpow.pop %v288
        %v291 = vcombine.high %v289, %v289
        %v293 = vsel %vm227, %v289, 0.0
        %v294 = vrot.slane %v293, 4
        %v295 = vadd.f32 %v293, %v294
        %v296 = vrot.slane %v295, 2
        %v297 = vadd.f32 %v295, %v296
        %v298 = vrot.slane %v297, 1
        %v299 = vadd.f32 %v297, %v298
        %v300 = vsel %vm227, %v291, 0.0
        %v301 = vrot.slane %v300, 4
        %v302 = vadd.f32 %v300, %v301
        %v303 = vrot.slane %v302, 2
        %v304 = vadd.f32 %v302, %v303
        %v305 = vrot.slane %v304, 1
        %v306 = vadd.f32 %v304, %v305
        %v307 = vrcp.pop %v258
        %v308 = vrcp.pop %v265
        %v311 = vcombine.low %v307, %v308
        %v313 = vmul.f32 %v248, %v311
        %v314 = vrcp.pop %v299
        %v315 = vrcp.pop %v306
        %v318 = vcombine.low %v314, %v315
        %v320 = vmul.f32 %v289, %v318
        %v321 = vsub.f32 %v313, %v320
        %v322 = vmul.f32 %v321, %v321
        %v323 = vadd.f32 %v322, 0.0
        %v325 = vcombine.high %v323, %v323
        %v327 = vsel %vm227, %v323, 0.0
        %v328 = vrot.slane %v327, 4
        %v329 = vadd.f32 %v327, %v328
        %v330 = vrot.slane %v329, 2
        %v331 = vadd.f32 %v329, %v330
        %v332 = vrot.slane %v331, 1
        %v333 = vadd.f32 %v331, %v332
        %v334 = vsel %vm227, %v325, 0.0
        %v335 = vrot.slane %v334, 4
        %v336 = vadd.f32 %v334, %v335
        %v337 = vrot.slane %v336, 2
        %v338 = vadd.f32 %v336, %v337
        %v339 = vrot.slane %v338, 1
        %v340 = vadd.f32 %v338, %v339
        %v343 = vcombine.low %v333, %v340
        %v345 = vunpack.c.l.s4 1966171168
        %v346 = vunpack.c.0.s8 %v345
        %v347 = vlaneseq
        %v348 = vshrl.u32 %v347, 7
        %v349 = vsub.s32 %v346, %v348
        %v350 = vrot.slane %v343, %v349
        %v352 = vunpack.c.l.s4 1966171168
        %v353 = vunpack.c.0.s8 %v352
        %v354 = vlaneseq
        %v355 = vshrl.u32 %v354, 7
        %v356 = vsub.s32 %v353, %v355
        %v357 = vrot.slane %v350, %v356
        %v359 = vlaneseq
        %vm360 = vcmp.ge.s32.totalorder %v359, 0
        %vm361 = vcmp.lt.s32.totalorder %v359, 256
        %vm362 = vmand %vm360, %vm361
        %363 = vst.msk [vmem:[%s219] sm:$0x3] %vm362, %v357
        %s364 = sand.u32 %s100, 1
        %s365 = scalar_lea.sflag [#allocation4], %s364
        %s366 = sand.u32 %s100, 1
        %s367 = smul.addr %s366, 2
        %s368 = scalar_lea.vmem [#allocation7], %s367
        // Predicated region
        $region37: #{tpu_custom_call.1} parent=27 // pred_check
          %p369 = pneg %p110
        $region38: #{tpu_custom_call.1} parent=27 // pred_check_branch
          %371 = sbr.rel (%p369) target = $region40
        $region39: #{tpu_custom_call.1} parent=27 // pred_region
          %s373 = ssub.s32 32, 32
          %374 = vsyncadd %s365, %s373
          %s375 = smul.addr %s27, 2
          %s376 = smul.addr %s26, 2
          %s377 = sadd.s32 %s375, %s376
          %s378 = smul.addr %s377, 16
          %s379 = scalar_lea.hbm %s2, %s378
          %s381 = sshll.u32 %s368, 4
          %s382 = int_to_ptr.vmem [resolvable:$true] %s381
          %384 = dma.vmem_to_hbm [thread:$0]  %s382, 32, %s379, %s365
        $region40: #{tpu_custom_call.1} parent=27 // pred_fallthru
          _
      $region28: #{tpu_custom_call.1} parent=5 // pred_fallthru
        _
      %p385 = scmp.le.s32.totalorder 2, %s17
      // Predicated region
      $region41: #{tpu_custom_call.1} parent=5 // pred_check
        %p386 = pneg %p385
      $region42: #{tpu_custom_call.1} parent=5 // pred_check_branch
        %388 = sbr.rel (%p386) target = $region44
      $region43: #{tpu_custom_call.1} parent=5 // pred_region
        %s389 = ssub.s32 %s17, 2
        // Predicated region
        $region45: #{tpu_custom_call.1} parent=43 // pred_check
          %p390 = pneg %p116
        $region46: #{tpu_custom_call.1} parent=43 // pred_check_branch
          %392 = sbr.rel (%p390) target = $region48
        $region47: #{tpu_custom_call.1} parent=43 // pred_region
          %s393 = sand.u32 %s101, 1
          %s394 = scalar_lea.sflag [#allocation4], %s393
          %s395 = sand.u32 %s101, 1
          %s396 = smul.addr %s395, 2
          %s397 = scalar_lea.vmem [#allocation7], %s396
          %398 = dma.done %s394, 32
        $region48: #{tpu_custom_call.1} parent=43 // pred_fallthru
          _
      $region44: #{tpu_custom_call.1} parent=5 // pred_fallthru
        _
    $region6: #{tpu_custom_call.1} parent=1 // loop_footer
      %s21 = sadd.s32 1, %s17
    $region7: #{tpu_custom_call.1} parent=1 // loop_footer_branch
      %16 = sbr.rel target = $region3
    $region8: #{tpu_custom_call.1} parent=1 // loop_exit
      _
    %399 = vsyncpa [#allocation3], 1
    %s400 = scalar_lea.sflag [#allocation3], 1
    %401 = vsyncpa %s400, 1
    %402 = vsyncpa [#allocation6], 1
    %s403 = scalar_lea.sflag [#allocation6], 1
    %404 = vsyncpa %s403, 1
    %405 = vsyncpa [#allocation4], 1
    %s406 = scalar_lea.sflag [#allocation4], 1
    %407 = vsyncpa %s406, 1

</llo_original>
